<compile_context>
chip_gen: v6e
topology: v6e:2x2x1
jax: 0.10.0
libtpu: 0.0.40
codegen_flags: <defaults>
</compile_context>

<pallas_src>
import jax
import jax.numpy as jnp
from jax.experimental import pallas as pl
from jax.experimental.pallas import tpu as pltpu


# --------------------------------------------------------------------------- #
# Kernel
# --------------------------------------------------------------------------- #
def afs_zxm_kernel(x_ref, wf_ref, bf_ref, w1_ref, b1_ref, w2_ref, b2_ref,
                   p_ref, e_ref, o_ref):
    x = x_ref[...]                                                  # (TB, D)

    # --- FinedController: fused block-diagonal Linear + ReLU (one MXU op) ---
    z = jnp.dot(x, wf_ref[...], preferred_element_type=jnp.float32) + bf_ref[...]
    z = jnp.maximum(z, 0.0)

    # Per-field softmax in a single pass, keeping the (TB, D) lane layout.
    # Subtracting the row-global max is mathematically identical per segment
    # (softmax is shift-invariant) and numerically safe (exp arg <= 0).
    m = jnp.max(z, axis=-1, keepdims=True)                          # (TB, 1)
    ez = jnp.exp(z - m)                                             # (TB, D)
    # Same-segment-sum matrix P: P[j, k] = 1 iff features j, k belong to the
    # same field => (ez @ P)[b, k] is that field's softmax denominator.
    denom = jnp.dot(ez, p_ref[...], preferred_element_type=jnp.float32)
    weight = ez * pl.reciprocal(denom, approx=True)                 # per-field softmax
    input_mlp = x * weight

    # --- Adacontroller: 2-layer MLP + softmax over the S fields -------------
    h = jnp.dot(input_mlp, w1_ref[...], preferred_element_type=jnp.float32) + b1_ref[...]
    h = jnp.maximum(h, 0.0)                                         # (TB, H)
    logits = jnp.dot(h, w2_ref[...], preferred_element_type=jnp.float32) + b2_ref[...]
    lm = jnp.max(logits, axis=-1, keepdims=True)
    el = jnp.exp(logits - lm)                                       # (TB, S)
    weight1 = el * pl.reciprocal(jnp.sum(el, axis=-1, keepdims=True), approx=True)

    # --- Final per-field rescale of the original field ----------------------
    # Expand (TB, S) -> (TB, D) with one tiny matmul (E[i, j] = 1 iff feature
    # j is in field i), then a single elementwise multiply.
    o_ref[...] = x * jnp.dot(weight1, e_ref[...], preferred_element_type=jnp.float32)


# --------------------------------------------------------------------------- #
# Wrapper
# --------------------------------------------------------------------------- #
def afs_zxm(field, wf_bd, bf, w1t, b1, w2t, b2, same_seg, expand, *, batch_tile=None):
    B, D = field.shape
    if batch_tile is None:
        batch_tile = B if B <= 512 else 512
    assert B % batch_tile == 0, "batch must be divisible by the batch tile"
    assert batch_tile == B or batch_tile % 8 == 0

    grid = (B // batch_tile,)

    def resident(arr):
        # Weights: same block for every grid step -> stays VMEM-resident.
        return pl.BlockSpec(arr.shape, lambda i: (0,) * arr.ndim)

    return pl.pallas_call(
        afs_zxm_kernel,
        out_shape=jax.ShapeDtypeStruct((B, D), jnp.float32),
        grid_spec=pltpu.PrefetchScalarGridSpec(
            num_scalar_prefetch=0,
            grid=grid,
            in_specs=[
                pl.BlockSpec((batch_tile, D), lambda i: (i, 0)),   # field (tiled over B)
                resident(wf_bd),
                resident(bf),
                resident(w1t),
                resident(b1),
                resident(w2t),
                resident(b2),
                resident(same_seg),
                resident(expand),
            ],
            out_specs=pl.BlockSpec((batch_tile, D), lambda i: (i, 0)),
        ),
        compiler_params=pltpu.CompilerParams(
            dimension_semantics=("parallel",)),
    )(field, wf_bd, bf, w1t, b1, w2t, b2, same_seg, expand)


# --------------------------------------------------------------------------- #
# Parameter construction (host side)
# --------------------------------------------------------------------------- #
def init_params(key, dims):
    """Per-field Linear(d_i, d_i) + Ada MLP params (xavier weights, zero biases)."""
    D, S = sum(dims), len(dims)
    H = D // 2
    keys = jax.random.split(key, S + 2)

    def xavier_normal(k, fan_out, fan_in):
        std = (2.0 / (fan_in + fan_out)) ** 0.5
        return std * jax.random.normal(k, (fan_out, fan_in), dtype=jnp.float32)

    wf_list = [xavier_normal(keys[i], d, d) for i, d in enumerate(dims)]
    bf_list = [jnp.zeros((d,), jnp.float32) for d in dims]
    w1 = xavier_normal(keys[S], H, D)
    b1 = jnp.zeros((H,), jnp.float32)
    w2 = xavier_normal(keys[S + 1], S, H)
    b2 = jnp.zeros((S,), jnp.float32)
    return wf_list, bf_list, w1, b1, w2, b2


def fuse_params(dims, wf_list, bf_list, w1, b1, w2, b2):
    """Pre-transpose / fuse everything so the kernel body has zero transposes."""
    D, S = sum(dims), len(dims)
    offs = [0]
    for d in dims:
        offs.append(offs[-1] + d)

    wf_bd = jnp.zeros((D, D), jnp.float32)       # block-diagonal, (in, out) layout
    same_seg = jnp.zeros((D, D), jnp.float32)    # P[j,k] = 1 iff same field
    expand = jnp.zeros((S, D), jnp.float32)      # E[i,j] = 1 iff feature j in field i
    for i, d in enumerate(dims):
        o = offs[i]
        wf_bd = wf_bd.at[o:o + d, o:o + d].set(wf_list[i].T)
        same_seg = same_seg.at[o:o + d, o:o + d].set(1.0)
        expand = expand.at[i, o:o + d].set(1.0)

    bf = jnp.concatenate(bf_list).reshape(1, D)
    return (wf_bd, bf, w1.T, b1.reshape(1, -1), w2.T, b2.reshape(1, -1),
            same_seg, expand)


# --------------------------------------------------------------------------- #
# Pure-JAX reference (mirrors the PyTorch forward literally)
# --------------------------------------------------------------------------- #
def reference(field, dims, wf_list, bf_list, w1, b1, w2, b2):
    offs = [0]
    for d in dims:
        offs.append(offs[-1] + d)
    parts = []
    for i in range(len(dims)):
        xi = field[:, offs[i]:offs[i + 1]]
        zi = jnp.maximum(xi @ wf_list[i].T + bf_list[i], 0.0)
        parts.append(jax.nn.softmax(zi, axis=1))
    weight = jnp.concatenate(parts, axis=1)
    input_mlp = field * weight
    h = jnp.maximum(input_mlp @ w1.T + b1, 0.0)
    weight1 = jax.nn.softmax(h @ w2.T + b2, axis=1)
    out = [field[:, offs[i]:offs[i + 1]] * weight1[:, i:i + 1]
           for i in range(len(dims))]
    return jnp.concatenate(out, axis=1)


# --------------------------------------------------------------------------- #
if __name__ == "__main__":
    # inputs_dim = {"f0": 8, "f1": 8, "f2": 16}  ->  dims, D = sum(dims)
    dims = [8, 8, 16]
    B, D = 8, sum(dims)

    key = jax.random.PRNGKey(0)
    kx, kp = jax.random.split(key)
    field = jax.random.normal(kx, (B, D), dtype=jnp.float32)

    raw = init_params(kp, dims)
    fused = fuse_params(dims, *raw)

    out = afs_zxm(field, *fused)
    out = jax.block_until_ready(out)

    ref = reference(field, dims, *raw)
    assert out.shape == (B, D)
    # Tolerance covers the EUP approximate-reciprocal used for the softmax denominators.
    assert jnp.allclose(out, ref, atol=5e-3, rtol=5e-3), \
        float(jnp.max(jnp.abs(out - ref)))

    print("KERNEL_OK")
</pallas_src>

<mosaic_0001>
module attributes {stable_mosaic.version = 11 : i64} {
  func.func @afs_zxm_kernel(%arg0: i32, %arg1: memref<8x32xf32, #tpu.memory_space<vmem>>, %arg2: memref<32x32xf32, #tpu.memory_space<vmem>>, %arg3: memref<1x32xf32, #tpu.memory_space<vmem>>, %arg4: memref<32x16xf32, #tpu.memory_space<vmem>>, %arg5: memref<1x16xf32, #tpu.memory_space<vmem>>, %arg6: memref<16x3xf32, #tpu.memory_space<vmem>>, %arg7: memref<1x3xf32, #tpu.memory_space<vmem>>, %arg8: memref<32x32xf32, #tpu.memory_space<vmem>>, %arg9: memref<3x32xf32, #tpu.memory_space<vmem>>, %arg10: memref<8x32xf32, #tpu.memory_space<vmem>>) attributes {dimension_semantics = [#tpu.dimension_semantics<parallel>], iteration_bounds = array<i64: 1>, scalar_prefetch = 0 : i64, scratch_operands = 0 : i64, tpu.core_type = #tpu.core_type<tc>, window_params = [{transform_indices = @transform_0, window_bounds = array<i64: 8, 32>}, {pipeline_mode = #tpu.pipeline_mode<synchronous>, transform_indices = @transform_1, window_bounds = array<i64: 32, 32>}, {pipeline_mode = #tpu.pipeline_mode<synchronous>, transform_indices = @transform_2, window_bounds = array<i64: 1, 32>}, {pipeline_mode = #tpu.pipeline_mode<synchronous>, transform_indices = @transform_3, window_bounds = array<i64: 32, 16>}, {pipeline_mode = #tpu.pipeline_mode<synchronous>, transform_indices = @transform_4, window_bounds = array<i64: 1, 16>}, {pipeline_mode = #tpu.pipeline_mode<synchronous>, transform_indices = @transform_5, window_bounds = array<i64: 16, 3>}, {pipeline_mode = #tpu.pipeline_mode<synchronous>, transform_indices = @transform_6, window_bounds = array<i64: 1, 3>}, {pipeline_mode = #tpu.pipeline_mode<synchronous>, transform_indices = @transform_7, window_bounds = array<i64: 32, 32>}, {pipeline_mode = #tpu.pipeline_mode<synchronous>, transform_indices = @transform_8, window_bounds = array<i64: 3, 32>}, {transform_indices = @transform_9, window_bounds = array<i64: 8, 32>}]} {
    %c0 = arith.constant 0 : index
    %c0_0 = arith.constant 0 : index
    %0 = vector.load %arg1[%c0, %c0_0] : memref<8x32xf32, #tpu.memory_space<vmem>>, vector<8x32xf32>
    %c0_1 = arith.constant 0 : index
    %c0_2 = arith.constant 0 : index
    %1 = vector.load %arg2[%c0_1, %c0_2] : memref<32x32xf32, #tpu.memory_space<vmem>>, vector<32x32xf32>
    %cst = arith.constant dense<0.000000e+00> : vector<8x32xf32>
    %2 = tpu.matmul %0, %1, %cst {dimension_numbers = #tpu.dot_dimension_numbers<[1], [0], [0], [1], [0, 0, 1, 1], [], []>} : vector<8x32xf32>, vector<32x32xf32>, vector<8x32xf32> -> vector<8x32xf32>
    %c0_3 = arith.constant 0 : index
    %c0_4 = arith.constant 0 : index
    %3 = vector.load %arg3[%c0_3, %c0_4] : memref<1x32xf32, #tpu.memory_space<vmem>>, vector<1x32xf32>
    %4 = vector.broadcast %3 : vector<1x32xf32> to vector<8x32xf32>
    %5 = arith.addf %2, %4 : vector<8x32xf32>
    %cst_5 = arith.constant 0.000000e+00 : f32
    %6 = vector.broadcast %cst_5 : f32 to vector<8x32xf32>
    %7 = arith.maximumf %5, %6 : vector<8x32xf32>
    %cst_6 = arith.constant dense<0xFF800000> : vector<8xf32>
    %8 = vector.multi_reduction <maximumf>, %7, %cst_6 [1] : vector<8x32xf32> to vector<8xf32>
    %9 = vector.shape_cast %8 : vector<8xf32> to vector<8x1xf32>
    %10 = vector.broadcast %9 : vector<8x1xf32> to vector<8x32xf32>
    %11 = arith.subf %7, %10 : vector<8x32xf32>
    %12 = math.exp %11 : vector<8x32xf32>
    %c0_7 = arith.constant 0 : index
    %c0_8 = arith.constant 0 : index
    %13 = vector.load %arg8[%c0_7, %c0_8] : memref<32x32xf32, #tpu.memory_space<vmem>>, vector<32x32xf32>
    %cst_9 = arith.constant dense<0.000000e+00> : vector<8x32xf32>
    %14 = tpu.matmul %12, %13, %cst_9 {dimension_numbers = #tpu.dot_dimension_numbers<[1], [0], [0], [1], [0, 0, 1, 1], [], []>} : vector<8x32xf32>, vector<32x32xf32>, vector<8x32xf32> -> vector<8x32xf32>
    %15 = tpu.reciprocal %14 {approx = true} : vector<8x32xf32> -> vector<8x32xf32>
    %16 = arith.mulf %12, %15 : vector<8x32xf32>
    %17 = arith.mulf %0, %16 : vector<8x32xf32>
    %c0_10 = arith.constant 0 : index
    %c0_11 = arith.constant 0 : index
    %18 = vector.load %arg4[%c0_10, %c0_11] : memref<32x16xf32, #tpu.memory_space<vmem>>, vector<32x16xf32>
    %cst_12 = arith.constant dense<0.000000e+00> : vector<8x16xf32>
    %19 = tpu.matmul %17, %18, %cst_12 {dimension_numbers = #tpu.dot_dimension_numbers<[1], [0], [0], [1], [0, 0, 1, 1], [], []>} : vector<8x32xf32>, vector<32x16xf32>, vector<8x16xf32> -> vector<8x16xf32>
    %c0_13 = arith.constant 0 : index
    %c0_14 = arith.constant 0 : index
    %20 = vector.load %arg5[%c0_13, %c0_14] : memref<1x16xf32, #tpu.memory_space<vmem>>, vector<1x16xf32>
    %21 = vector.broadcast %20 : vector<1x16xf32> to vector<8x16xf32>
    %22 = arith.addf %19, %21 : vector<8x16xf32>
    %cst_15 = arith.constant 0.000000e+00 : f32
    %23 = vector.broadcast %cst_15 : f32 to vector<8x16xf32>
    %24 = arith.maximumf %22, %23 : vector<8x16xf32>
    %c0_16 = arith.constant 0 : index
    %c0_17 = arith.constant 0 : index
    %25 = vector.load %arg6[%c0_16, %c0_17] : memref<16x3xf32, #tpu.memory_space<vmem>>, vector<16x3xf32>
    %cst_18 = arith.constant dense<0.000000e+00> : vector<8x3xf32>
    %26 = tpu.matmul %24, %25, %cst_18 {dimension_numbers = #tpu.dot_dimension_numbers<[1], [0], [0], [1], [0, 0, 1, 1], [], []>} : vector<8x16xf32>, vector<16x3xf32>, vector<8x3xf32> -> vector<8x3xf32>
    %c0_19 = arith.constant 0 : index
    %c0_20 = arith.constant 0 : index
    %27 = vector.load %arg7[%c0_19, %c0_20] : memref<1x3xf32, #tpu.memory_space<vmem>>, vector<1x3xf32>
    %28 = vector.broadcast %27 : vector<1x3xf32> to vector<8x3xf32>
    %29 = arith.addf %26, %28 : vector<8x3xf32>
    %cst_21 = arith.constant dense<0xFF800000> : vector<8xf32>
    %30 = vector.multi_reduction <maximumf>, %29, %cst_21 [1] : vector<8x3xf32> to vector<8xf32>
    %31 = vector.shape_cast %30 : vector<8xf32> to vector<8x1xf32>
    %32 = vector.broadcast %31 : vector<8x1xf32> to vector<8x3xf32>
    %33 = arith.subf %29, %32 : vector<8x3xf32>
    %34 = math.exp %33 : vector<8x3xf32>
    %cst_22 = arith.constant dense<0.000000e+00> : vector<8xf32>
    %35 = vector.multi_reduction <add>, %34, %cst_22 [1] : vector<8x3xf32> to vector<8xf32>
    %36 = vector.shape_cast %35 : vector<8xf32> to vector<8x1xf32>
    %37 = tpu.reciprocal %36 {approx = true} : vector<8x1xf32> -> vector<8x1xf32>
    %38 = vector.broadcast %37 : vector<8x1xf32> to vector<8x3xf32>
    %39 = arith.mulf %34, %38 : vector<8x3xf32>
    %c0_23 = arith.constant 0 : index
    %c0_24 = arith.constant 0 : index
    %40 = vector.load %arg9[%c0_23, %c0_24] : memref<3x32xf32, #tpu.memory_space<vmem>>, vector<3x32xf32>
    %cst_25 = arith.constant dense<0.000000e+00> : vector<8x32xf32>
    %41 = tpu.matmul %39, %40, %cst_25 {dimension_numbers = #tpu.dot_dimension_numbers<[1], [0], [0], [1], [0, 0, 1, 1], [], []>} : vector<8x3xf32>, vector<3x32xf32>, vector<8x32xf32> -> vector<8x32xf32>
    %42 = arith.mulf %0, %41 : vector<8x32xf32>
    %c0_26 = arith.constant 0 : index
    %c0_27 = arith.constant 0 : index
    %43 = vector.load %arg10[%c0_26, %c0_27] : memref<8x32xf32, #tpu.memory_space<vmem>>, vector<8x32xf32>
    tpu.vector_store %arg10[%c0_26, %c0_27], %42 {strides = array<i32>} : memref<8x32xf32, #tpu.memory_space<vmem>>, vector<8x32xf32>,
    return
  }
  func.func @transform_0(%arg0: i32) -> (i32, i32) {
    %c0_i32 = arith.constant 0 : i32
    %c0_i32_0 = arith.constant 0 : i32
    return %arg0, %c0_i32 : i32, i32
  }
  func.func @transform_1(%arg0: i32) -> (i32, i32) {
    %c0_i32 = arith.constant 0 : i32
    %c0_i32_0 = arith.constant 0 : i32
    %c0_i32_1 = arith.constant 0 : i32
    return %c0_i32, %c0_i32_0 : i32, i32
  }
  func.func @transform_2(%arg0: i32) -> (i32, i32) {
    %c0_i32 = arith.constant 0 : i32
    %c0_i32_0 = arith.constant 0 : i32
    %c0_i32_1 = arith.constant 0 : i32
    return %c0_i32, %c0_i32_0 : i32, i32
  }
  func.func @transform_3(%arg0: i32) -> (i32, i32) {
    %c0_i32 = arith.constant 0 : i32
    %c0_i32_0 = arith.constant 0 : i32
    %c0_i32_1 = arith.constant 0 : i32
    return %c0_i32, %c0_i32_0 : i32, i32
  }
  func.func @transform_4(%arg0: i32) -> (i32, i32) {
    %c0_i32 = arith.constant 0 : i32
    %c0_i32_0 = arith.constant 0 : i32
    %c0_i32_1 = arith.constant 0 : i32
    return %c0_i32, %c0_i32_0 : i32, i32
  }
  func.func @transform_5(%arg0: i32) -> (i32, i32) {
    %c0_i32 = arith.constant 0 : i32
    %c0_i32_0 = arith.constant 0 : i32
    %c0_i32_1 = arith.constant 0 : i32
    return %c0_i32, %c0_i32_0 : i32, i32
  }
  func.func @transform_6(%arg0: i32) -> (i32, i32) {
    %c0_i32 = arith.constant 0 : i32
    %c0_i32_0 = arith.constant 0 : i32
    %c0_i32_1 = arith.constant 0 : i32
    return %c0_i32, %c0_i32_0 : i32, i32
  }
  func.func @transform_7(%arg0: i32) -> (i32, i32) {
    %c0_i32 = arith.constant 0 : i32
    %c0_i32_0 = arith.constant 0 : i32
    %c0_i32_1 = arith.constant 0 : i32
    return %c0_i32, %c0_i32_0 : i32, i32
  }
  func.func @transform_8(%arg0: i32) -> (i32, i32) {
    %c0_i32 = arith.constant 0 : i32
    %c0_i32_0 = arith.constant 0 : i32
    %c0_i32_1 = arith.constant 0 : i32
    return %c0_i32, %c0_i32_0 : i32, i32
  }
  func.func @transform_9(%arg0: i32) -> (i32, i32) {
    %c0_i32 = arith.constant 0 : i32
    %c0_i32_0 = arith.constant 0 : i32
    return %arg0, %c0_i32 : i32, i32
  }
}

</mosaic_0001>

<llo_original>
// kernel: tpu_custom_call.1
$region0: #{tpu_custom_call.1}
  #allocation0 [shape = 'u32[]', space=smem, size = 0x4, offset = 0x4, fixed_abs, tag = 'smem constant byte address 0x4 - core index']
  #allocation1 [shape = 'u32[144,128]{1,0:T(1,128)}', space=vmem, size = 0x12000, scoped, tag = 'internal scratch']
  %s0 = inlined_call_operand.hbm [shape: f32[8,32], index: 0, kind: input, shape index: {}]
  %s1 = inlined_call_operand.vmem [shape: f32[32,32], index: 1, kind: input, shape index: {}]
  %s2 = inlined_call_operand.vmem [shape: f32[1,32], index: 2, kind: input, shape index: {}]
  %s3 = inlined_call_operand.vmem [shape: f32[32,16], index: 3, kind: input, shape index: {}]
  %s4 = inlined_call_operand.vmem [shape: f32[1,16], index: 4, kind: input, shape index: {}]
  %s5 = inlined_call_operand.vmem [shape: f32[16,3], index: 5, kind: input, shape index: {}]
  %s6 = inlined_call_operand.vmem [shape: f32[1,3], index: 6, kind: input, shape index: {}]
  %s7 = inlined_call_operand.vmem [shape: f32[32,32], index: 7, kind: input, shape index: {}]
  %s8 = inlined_call_operand.vmem [shape: f32[3,32], index: 8, kind: input, shape index: {}]
  %s9 = inlined_call_operand.hbm [shape: f32[8,32], index: 9, kind: output, shape index: {}]
  %s10 = sld [smem:[#allocation0]]
  $region50: #{tpu_custom_call.1} parent=0
    _
  %s12 = ssub.s32 1, %s10
  %s13 = scalar_select 0, %s12, %s10
  $region1: #{tpu_custom_call.1} parent=0
    #allocation2 [shape = 'u8[4096]{0}', space=vmem, size = 0x1000, scoped, tag = 'input window, operand 0, single buffered']
    #allocation3 [shape = 's32[1]{0}', space=sflag, size = 0x4, scoped, tag = 'scoped memory for tpu_custom_call.1']
    #allocation4 [shape = 's32[1]{0}', space=sflag, size = 0x4, scoped, tag = 'scoped memory for tpu_custom_call.1']
    #allocation5 [shape = 'u8[4096]{0}', space=vmem, size = 0x1000, scoped, tag = 'output window, operand 0, single buffered']
    %14 = vsyncpa [#allocation3], 0
    %15 = vsyncpa [#allocation4], 0
    // Predicated region
    $region2: #{tpu_custom_call.1} parent=1 // pred_check
      _
    $region3: #{tpu_custom_call.1} parent=1 // pred_check_branch
      %17 = sbr.rel (0) target = $region5
    $region4: #{tpu_custom_call.1} parent=1 // pred_region
      %s19 = ssub.s32 128, 128
      %20 = vsyncadd [#allocation3], %s19
      %s22 = sshll.u32 [#allocation2], 4
      %s23 = int_to_ptr.vmem [resolvable:$true] %s22
      %25 = dma.hbm_to_vmem [thread:$0]  %s0, 128, %s23, [#allocation3]
    $region5: #{tpu_custom_call.1} parent=1 // pred_fallthru
      _
    // Predicated region
    $region6: #{tpu_custom_call.1} parent=1 // pred_check
      _
    $region7: #{tpu_custom_call.1} parent=1 // pred_check_branch
      %27 = sbr.rel (0) target = $region9
    $region8: #{tpu_custom_call.1} parent=1 // pred_region
      _
    $region9: #{tpu_custom_call.1} parent=1 // pred_fallthru
      _
    // Predicated region
    $region10: #{tpu_custom_call.1} parent=1 // pred_check
      _
    $region11: #{tpu_custom_call.1} parent=1 // pred_check_branch
      %29 = sbr.rel (0) target = $region13
    $region12: #{tpu_custom_call.1} parent=1 // pred_region
      _
    $region13: #{tpu_custom_call.1} parent=1 // pred_fallthru
      _
    // Predicated region
    $region14: #{tpu_custom_call.1} parent=1 // pred_check
      _
    $region15: #{tpu_custom_call.1} parent=1 // pred_check_branch
      %31 = sbr.rel (0) target = $region17
    $region16: #{tpu_custom_call.1} parent=1 // pred_region
      _
    $region17: #{tpu_custom_call.1} parent=1 // pred_fallthru
      _
    // Predicated region
    $region18: #{tpu_custom_call.1} parent=1 // pred_check
      _
    $region19: #{tpu_custom_call.1} parent=1 // pred_check_branch
      %33 = sbr.rel (0) target = $region21
    $region20: #{tpu_custom_call.1} parent=1 // pred_region
      _
    $region21: #{tpu_custom_call.1} parent=1 // pred_fallthru
      _
    // Predicated region
    $region22: #{tpu_custom_call.1} parent=1 // pred_check
      _
    $region23: #{tpu_custom_call.1} parent=1 // pred_check_branch
      %35 = sbr.rel (0) target = $region25
    $region24: #{tpu_custom_call.1} parent=1 // pred_region
      _
    $region25: #{tpu_custom_call.1} parent=1 // pred_fallthru
      _
    // Predicated region
    $region26: #{tpu_custom_call.1} parent=1 // pred_check
      _
    $region27: #{tpu_custom_call.1} parent=1 // pred_check_branch
      %37 = sbr.rel (0) target = $region29
    $region28: #{tpu_custom_call.1} parent=1 // pred_region
      _
    $region29: #{tpu_custom_call.1} parent=1 // pred_fallthru
      _
    // Predicated region
    $region30: #{tpu_custom_call.1} parent=1 // pred_check
      _
    $region31: #{tpu_custom_call.1} parent=1 // pred_check_branch
      %39 = sbr.rel (0) target = $region33
    $region32: #{tpu_custom_call.1} parent=1 // pred_region
      _
    $region33: #{tpu_custom_call.1} parent=1 // pred_fallthru
      _
    // Predicated region
    $region34: #{tpu_custom_call.1} parent=1 // pred_check
      _
    $region35: #{tpu_custom_call.1} parent=1 // pred_check_branch
      %41 = sbr.rel (0) target = $region37
    $region36: #{tpu_custom_call.1} parent=1 // pred_region
      _
    $region37: #{tpu_custom_call.1} parent=1 // pred_fallthru
      _
    // Predicated region
    $region38: #{tpu_custom_call.1} parent=1 // pred_check
      _
    $region39: #{tpu_custom_call.1} parent=1 // pred_check_branch
      %43 = sbr.rel (0) target = $region41
    $region40: #{tpu_custom_call.1} parent=1 // pred_region
      %44 = dma.done [#allocation3], 128
    $region41: #{tpu_custom_call.1} parent=1 // pred_fallthru
      _
    %v45 = vld [vmem:[#allocation2] sm:$0xff]
    %v46 = vld [vmem:[%s1] sm:$0xff]
    %v47 = vld [vmem:[%s1 + $0x8] sm:$0xff]
    %v48 = vld [vmem:[%s1 + $0x10] sm:$0xff]
    %v49 = vld [vmem:[%s1 + $0x18] sm:$0xff]
    %v50 = vld [vmem:[%s2] sm:$0x1]
    %v52 = vlaneseq
    %v53 = vshrl.u32 %v52, 7
    %v54 = vsub.s32 0, %v53
    %v55 = vrot.slane %v50, %v54
    %vm57 = vcmask 261120
    %v59 = vsel %vm57, %v45, 0
    %61 = vmatprep.subr.mxu0 0.0
    %62 = vmatpush1.msra.mxu0 0.0
    %63 = vmatprep.subr.mxu0 0.0
    %64 = vmatpush1.msra.mxu0 0.0
    %65 = vmatprep.subr.mxu0 0.0
    %66 = vmatpush1.msra.mxu0 0.0
    %67 = vmatprep.subr.mxu0 0.0
    %68 = vmatpush1.msra.mxu0 0.0
    %69 = vmatprep.subr.mxu0 0.0
    %70 = vmatpush1.msra.mxu0 0.0
    %71 = vmatprep.subr.mxu0 0.0
    %72 = vmatpush1.msra.mxu0 0.0
    %73 = vmatprep.subr.mxu0 0.0
    %74 = vmatpush1.msra.mxu0 0.0
    %75 = vmatprep.subr.mxu0 0.0
    %76 = vmatpush1.msra.mxu0 0.0
    %77 = vmatprep.subr.mxu0 0.0
    %78 = vmatpush1.msra.mxu0 0.0
    %79 = vmatprep.subr.mxu0 0.0
    %80 = vmatpush1.msra.mxu0 0.0
    %81 = vmatprep.subr.mxu0 0.0
    %82 = vmatpush1.msra.mxu0 0.0
    %83 = vmatprep.subr.mxu0 0.0
    %84 = vmatpush1.msra.mxu0 0.0
    %85 = vmatprep.subr.mxu0 0.0
    %86 = vmatpush1.msra.mxu0 %v49
    %87 = vmatprep.subr.mxu0 0.0
    %88 = vmatpush1.msra.mxu0 %v48
    %89 = vmatprep.subr.mxu0 0.0
    %90 = vmatpush1.msra.mxu0 %v47
    %91 = vmatprep.subr.mxu0 0.0
    %92 = vmatpush1.msra.mxu0 %v46
    %93 = vmatprep.subr.mxu0 0.0
    %94 = vmatpush2.msra.mxu0 0.0
    %95 = vmatprep.subr.mxu0 0.0
    %96 = vmatpush2.msra.mxu0 0.0
    %97 = vmatprep.subr.mxu0 0.0
    %98 = vmatpush2.msra.mxu0 0.0
    %99 = vmatprep.subr.mxu0 0.0
    %100 = vmatpush2.msra.mxu0 0.0
    %101 = vmatprep.subr.mxu0 0.0
    %102 = vmatpush2.msra.mxu0 0.0
    %103 = vmatprep.subr.mxu0 0.0
    %104 = vmatpush2.msra.mxu0 0.0
    %105 = vmatprep.subr.mxu0 0.0
    %106 = vmatpush2.msra.mxu0 0.0
    %107 = vmatprep.subr.mxu0 0.0
    %108 = vmatpush2.msra.mxu0 0.0
    %109 = vmatprep.subr.mxu0 0.0
    %110 = vmatpush2.msra.mxu0 0.0
    %111 = vmatprep.subr.mxu0 0.0
    %112 = vmatpush2.msra.mxu0 0.0
    %113 = vmatprep.subr.mxu0 0.0
    %114 = vmatpush2.msra.mxu0 0.0
    %115 = vmatprep.subr.mxu0 0.0
    %116 = vmatpush2.msra.mxu0 0.0
    %117 = vmatprep.subr.mxu0 0.0
    %118 = vmatpush2.msra.mxu0 0.0
    %119 = vmatprep.subr.mxu0 0.0
    %120 = vmatpush2.msra.mxu0 0.0
    %121 = vmatprep.subr.mxu0 0.0
    %122 = vmatpush2.msra.mxu0 0.0
    %123 = vmatprep.subr.mxu0 0.0
    %124 = vmatpush2.msra.mxu0 0.0
    %125 = vmatprep.mubr.f32.mxu0 0.0
    %126 = vmatmul.mubr.f32.gmra.mxu0 %v59
    %v127 = vpop.f32.mrf.mxu0
    %v128 = vadd.f32 %v55, %v127
    %v129 = vpop.f32.mrf.mxu0
    %130 = vdwg.mxu0
    %v131 = vmax.f32 %v128, 0.0
    %v132 = vsel %vm57, %v131, -inf
    %133 = vmax.xlane.f32.xlu0 %v132
    %v134 = vpop.xlane.xlu0 %133
    %v135 = vsub.f32 %v131, %v134
    %v136 = vmul.f32 %v135, 1.442695
    %v137 = vpow.pop %v136
    %v138 = vld [vmem:[%s7] sm:$0xff]
    %v139 = vld [vmem:[%s7 + $0x8] sm:$0xff]
    %v140 = vld [vmem:[%s7 + $0x10] sm:$0xff]
    %v141 = vld [vmem:[%s7 + $0x18] sm:$0xff]
    %v143 = vsel %vm57, %v137, 0
    %145 = vmatprep.subr.mxu0 0.0
    %146 = vmatpush1.msra.mxu0 0.0
    %147 = vmatprep.subr.mxu0 0.0
    %148 = vmatpush1.msra.mxu0 0.0
    %149 = vmatprep.subr.mxu0 0.0
    %150 = vmatpush1.msra.mxu0 0.0
    %151 = vmatprep.subr.mxu0 0.0
    %152 = vmatpush1.msra.mxu0 0.0
    %153 = vmatprep.subr.mxu0 0.0
    %154 = vmatpush1.msra.mxu0 0.0
    %155 = vmatprep.subr.mxu0 0.0
    %156 = vmatpush1.msra.mxu0 0.0
    %157 = vmatprep.subr.mxu0 0.0
    %158 = vmatpush1.msra.mxu0 0.0
    %159 = vmatprep.subr.mxu0 0.0
    %160 = vmatpush1.msra.mxu0 0.0
    %161 = vmatprep.subr.mxu0 0.0
    %162 = vmatpush1.msra.mxu0 0.0
    %163 = vmatprep.subr.mxu0 0.0
    %164 = vmatpush1.msra.mxu0 0.0
    %165 = vmatprep.subr.mxu0 0.0
    %166 = vmatpush1.msra.mxu0 0.0
    %167 = vmatprep.subr.mxu0 0.0
    %168 = vmatpush1.msra.mxu0 0.0
    %169 = vmatprep.subr.mxu0 0.0
    %170 = vmatpush1.msra.mxu0 %v141
    %171 = vmatprep.subr.mxu0 0.0
    %172 = vmatpush1.msra.mxu0 %v140
    %173 = vmatprep.subr.mxu0 0.0
    %174 = vmatpush1.msra.mxu0 %v139
    %175 = vmatprep.subr.mxu0 0.0
    %176 = vmatpush1.msra.mxu0 %v138
    %177 = vmatprep.subr.mxu0 0.0
    %178 = vmatpush2.msra.mxu0 0.0
    %179 = vmatprep.subr.mxu0 0.0
    %180 = vmatpush2.msra.mxu0 0.0
    %181 = vmatprep.subr.mxu0 0.0
    %182 = vmatpush2.msra.mxu0 0.0
    %183 = vmatprep.subr.mxu0 0.0
    %184 = vmatpush2.msra.mxu0 0.0
    %185 = vmatprep.subr.mxu0 0.0
    %186 = vmatpush2.msra.mxu0 0.0
    %187 = vmatprep.subr.mxu0 0.0
    %188 = vmatpush2.msra.mxu0 0.0
    %189 = vmatprep.subr.mxu0 0.0
    %190 = vmatpush2.msra.mxu0 0.0
    %191 = vmatprep.subr.mxu0 0.0
    %192 = vmatpush2.msra.mxu0 0.0
    %193 = vmatprep.subr.mxu0 0.0
    %194 = vmatpush2.msra.mxu0 0.0
    %195 = vmatprep.subr.mxu0 0.0
    %196 = vmatpush2.msra.mxu0 0.0
    %197 = vmatprep.subr.mxu0 0.0
    %198 = vmatpush2.msra.mxu0 0.0
    %199 = vmatprep.subr.mxu0 0.0
    %200 = vmatpush2.msra.mxu0 0.0
    %201 = vmatprep.subr.mxu0 0.0
    %202 = vmatpush2.msra.mxu0 0.0
    %203 = vmatprep.subr.mxu0 0.0
    %204 = vmatpush2.msra.mxu0 0.0
    %205 = vmatprep.subr.mxu0 0.0
    %206 = vmatpush2.msra.mxu0 0.0
    %207 = vmatprep.subr.mxu0 0.0
    %208 = vmatpush2.msra.mxu0 0.0
    %209 = vmatprep.mubr.f32.mxu0 0.0
    %210 = vmatmul.mubr.f32.gmra.mxu0 %v143
    %v211 = vpop.f32.mrf.mxu0
    %v212 = vadd.f32 0.0, %v211
    %v213 = vpop.f32.mrf.mxu0
    %214 = vdwg.mxu0
    %v215 = vrcp.pop %v212
    %v216 = vmul.f32 %v137, %v215
    %v217 = vmul.f32 %v45, %v216
    %v218 = vld [vmem:[%s3] sm:$0xff]
    %v219 = vld [vmem:[%s3 + $0x8] sm:$0xff]
    %v220 = vld [vmem:[%s3 + $0x10] sm:$0xff]
    %v221 = vld [vmem:[%s3 + $0x18] sm:$0xff]
    %v222 = vld [vmem:[%s4] sm:$0x1]
    %v224 = vlaneseq
    %v225 = vshrl.u32 %v224, 7
    %v226 = vsub.s32 0, %v225
    %v227 = vrot.slane %v222, %v226
    %v230 = vsel %vm57, %v217, 0
    %232 = vmatprep.subr.mxu0 0.0
    %233 = vmatpush1.msra.mxu0 0.0
    %234 = vmatprep.subr.mxu0 0.0
    %235 = vmatpush1.msra.mxu0 0.0
    %236 = vmatprep.subr.mxu0 0.0
    %237 = vmatpush1.msra.mxu0 0.0
    %238 = vmatprep.subr.mxu0 0.0
    %239 = vmatpush1.msra.mxu0 0.0
    %240 = vmatprep.subr.mxu0 0.0
    %241 = vmatpush1.msra.mxu0 0.0
    %242 = vmatprep.subr.mxu0 0.0
    %243 = vmatpush1.msra.mxu0 0.0
    %244 = vmatprep.subr.mxu0 0.0
    %245 = vmatpush1.msra.mxu0 0.0
    %246 = vmatprep.subr.mxu0 0.0
    %247 = vmatpush1.msra.mxu0 0.0
    %248 = vmatprep.subr.mxu0 0.0
    %249 = vmatpush1.msra.mxu0 0.0
    %250 = vmatprep.subr.mxu0 0.0
    %251 = vmatpush1.msra.mxu0 0.0
    %252 = vmatprep.subr.mxu0 0.0
    %253 = vmatpush1.msra.mxu0 0.0
    %254 = vmatprep.subr.mxu0 0.0
    %255 = vmatpush1.msra.mxu0 0.0
    %256 = vmatprep.subr.mxu0 0.0
    %257 = vmatpush1.msra.mxu0 %v221
    %258 = vmatprep.subr.mxu0 0.0
    %259 = vmatpush1.msra.mxu0 %v220
    %260 = vmatprep.subr.mxu0 0.0
    %261 = vmatpush1.msra.mxu0 %v219
    %262 = vmatprep.subr.mxu0 0.0
    %263 = vmatpush1.msra.mxu0 %v218
    %264 = vmatprep.subr.mxu0 0.0
    %265 = vmatpush2.msra.mxu0 0.0
    %266 = vmatprep.subr.mxu0 0.0
    %267 = vmatpush2.msra.mxu0 0.0
    %268 = vmatprep.subr.mxu0 0.0
    %269 = vmatpush2.msra.mxu0 0.0
    %270 = vmatprep.subr.mxu0 0.0
    %271 = vmatpush2.msra.mxu0 0.0
    %272 = vmatprep.subr.mxu0 0.0
    %273 = vmatpush2.msra.mxu0 0.0
    %274 = vmatprep.subr.mxu0 0.0
    %275 = vmatpush2.msra.mxu0 0.0
    %276 = vmatprep.subr.mxu0 0.0
    %277 = vmatpush2.msra.mxu0 0.0
    %278 = vmatprep.subr.mxu0 0.0
    %279 = vmatpush2.msra.mxu0 0.0
    %280 = vmatprep.subr.mxu0 0.0
    %281 = vmatpush2.msra.mxu0 0.0
    %282 = vmatprep.subr.mxu0 0.0
    %283 = vmatpush2.msra.mxu0 0.0
    %284 = vmatprep.subr.mxu0 0.0
    %285 = vmatpush2.msra.mxu0 0.0
    %286 = vmatprep.subr.mxu0 0.0
    %287 = vmatpush2.msra.mxu0 0.0
    %288 = vmatprep.subr.mxu0 0.0
    %289 = vmatpush2.msra.mxu0 0.0
    %290 = vmatprep.subr.mxu0 0.0
    %291 = vmatpush2.msra.mxu0 0.0
    %292 = vmatprep.subr.mxu0 0.0
    %293 = vmatpush2.msra.mxu0 0.0
    %294 = vmatprep.subr.mxu0 0.0
    %295 = vmatpush2.msra.mxu0 0.0
    %296 = vmatprep.mubr.f32.mxu0 0.0
    %297 = vmatmul.mubr.f32.gmra.mxu0 %v230
    %v298 = vpop.f32.mrf.mxu0
    %v299 = vadd.f32 %v227, %v298
    %v300 = vpop.f32.mrf.mxu0
    %301 = vdwg.mxu0
    %v302 = vmax.f32 %v299, 0.0
    %v303 = vld [vmem:[%s5] sm:$0xff]
    %v304 = vld [vmem:[%s5 + $0x8] sm:$0xff]
    %v305 = vld [vmem:[%s6] sm:$0x1]
    %v307 = vlaneseq
    %v308 = vshrl.u32 %v307, 7
    %v309 = vsub.s32 0, %v308
    %v310 = vrot.slane %v305, %v309
    %vm312 = vcmask 130048
    %v314 = vsel %vm312, %v302, 0
    %316 = vmatprep.subr.mxu0 0.0
    %317 = vmatpush1.msra.mxu0 0.0
    %318 = vmatprep.subr.mxu0 0.0
    %319 = vmatpush1.msra.mxu0 0.0
    %320 = vmatprep.subr.mxu0 0.0
    %321 = vmatpush1.msra.mxu0 0.0
    %322 = vmatprep.subr.mxu0 0.0
    %323 = vmatpush1.msra.mxu0 0.0
    %324 = vmatprep.subr.mxu0 0.0
    %325 = vmatpush1.msra.mxu0 0.0
    %326 = vmatprep.subr.mxu0 0.0
    %327 = vmatpush1.msra.mxu0 0.0
    %328 = vmatprep.subr.mxu0 0.0
    %329 = vmatpush1.msra.mxu0 0.0
    %330 = vmatprep.subr.mxu0 0.0
    %331 = vmatpush1.msra.mxu0 0.0
    %332 = vmatprep.subr.mxu0 0.0
    %333 = vmatpush1.msra.mxu0 0.0
    %334 = vmatprep.subr.mxu0 0.0
    %335 = vmatpush1.msra.mxu0 0.0
    %336 = vmatprep.subr.mxu0 0.0
    %337 = vmatpush1.msra.mxu0 0.0
    %338 = vmatprep.subr.mxu0 0.0
    %339 = vmatpush1.msra.mxu0 0.0
    %340 = vmatprep.subr.mxu0 0.0
    %341 = vmatpush1.msra.mxu0 0.0
    %342 = vmatprep.subr.mxu0 0.0
    %343 = vmatpush1.msra.mxu0 0.0
    %344 = vmatprep.subr.mxu0 0.0
    %345 = vmatpush1.msra.mxu0 %v304
    %346 = vmatprep.subr.mxu0 0.0
    %347 = vmatpush1.msra.mxu0 %v303
    %348 = vmatprep.subr.mxu0 0.0
    %349 = vmatpush2.msra.mxu0 0.0
    %350 = vmatprep.subr.mxu0 0.0
    %351 = vmatpush2.msra.mxu0 0.0
    %352 = vmatprep.subr.mxu0 0.0
    %353 = vmatpush2.msra.mxu0 0.0
    %354 = vmatprep.subr.mxu0 0.0
    %355 = vmatpush2.msra.mxu0 0.0
    %356 = vmatprep.subr.mxu0 0.0
    %357 = vmatpush2.msra.mxu0 0.0
    %358 = vmatprep.subr.mxu0 0.0
    %359 = vmatpush2.msra.mxu0 0.0
    %360 = vmatprep.subr.mxu0 0.0
    %361 = vmatpush2.msra.mxu0 0.0
    %362 = vmatprep.subr.mxu0 0.0
    %363 = vmatpush2.msra.mxu0 0.0
    %364 = vmatprep.subr.mxu0 0.0
    %365 = vmatpush2.msra.mxu0 0.0
    %366 = vmatprep.subr.mxu0 0.0
    %367 = vmatpush2.msra.mxu0 0.0
    %368 = vmatprep.subr.mxu0 0.0
    %369 = vmatpush2.msra.mxu0 0.0
    %370 = vmatprep.subr.mxu0 0.0
    %371 = vmatpush2.msra.mxu0 0.0
    %372 = vmatprep.subr.mxu0 0.0
    %373 = vmatpush2.msra.mxu0 0.0
    %374 = vmatprep.subr.mxu0 0.0
    %375 = vmatpush2.msra.mxu0 0.0
    %376 = vmatprep.subr.mxu0 0.0
    %377 = vmatpush2.msra.mxu0 0.0
    %378 = vmatprep.subr.mxu0 0.0
    %379 = vmatpush2.msra.mxu0 0.0
    %380 = vmatprep.mubr.f32.mxu0 0.0
    %381 = vmatmul.mubr.f32.gmra.mxu0 %v314
    %v382 = vpop.f32.mrf.mxu0
    %v383 = vadd.f32 %v310, %v382
    %v384 = vpop.f32.mrf.mxu0
    %385 = vdwg.mxu0
    %vm386 = vcmask 23552
    %v387 = vsel %vm386, %v383, -inf
    %388 = vmax.xlane.f32.xlu0 %v387
    %v389 = vpop.xlane.xlu0 %388
    %v390 = vsub.f32 %v383, %v389
    %v391 = vmul.f32 %v390, 1.442695
    %v392 = vpow.pop %v391
    %v393 = vsel %vm386, %v392, 0.0
    %394 = vadd.xlane.f32.xlu0 %v393
    %v395 = vpop.xlane.xlu0 %394
    %v396 = vrcp.pop %v395
    %v397 = vmul.f32 %v392, %v396
    %v398 = vld [vmem:[%s8] sm:$0x7]
    %v400 = vsel %vm386, %v397, 0
    %vm402 = vcmask 1042432
    %v404 = vsel %vm402, %v398, 0
    %406 = vmatprep.subr.mxu0 0.0
    %407 = vmatpush1.msra.mxu0 0.0
    %408 = vmatprep.subr.mxu0 0.0
    %409 = vmatpush1.msra.mxu0 0.0
    %410 = vmatprep.subr.mxu0 0.0
    %411 = vmatpush1.msra.mxu0 0.0
    %412 = vmatprep.subr.mxu0 0.0
    %413 = vmatpush1.msra.mxu0 0.0
    %414 = vmatprep.subr.mxu0 0.0
    %415 = vmatpush1.msra.mxu0 0.0
    %416 = vmatprep.subr.mxu0 0.0
    %417 = vmatpush1.msra.mxu0 0.0
    %418 = vmatprep.subr.mxu0 0.0
    %419 = vmatpush1.msra.mxu0 0.0
    %420 = vmatprep.subr.mxu0 0.0
    %421 = vmatpush1.msra.mxu0 0.0
    %422 = vmatprep.subr.mxu0 0.0
    %423 = vmatpush1.msra.mxu0 0.0
    %424 = vmatprep.subr.mxu0 0.0
    %425 = vmatpush1.msra.mxu0 0.0
    %426 = vmatprep.subr.mxu0 0.0
    %427 = vmatpush1.msra.mxu0 0.0
    %428 = vmatprep.subr.mxu0 0.0
    %429 = vmatpush1.msra.mxu0 0.0
    %430 = vmatprep.subr.mxu0 0.0
    %431 = vmatpush1.msra.mxu0 0.0
    %432 = vmatprep.subr.mxu0 0.0
    %433 = vmatpush1.msra.mxu0 0.0
    %434 = vmatprep.subr.mxu0 0.0
    %435 = vmatpush1.msra.mxu0 0.0
    %436 = vmatprep.subr.mxu0 0.0
    %437 = vmatpush1.msra.mxu0 %v404
    %438 = vmatprep.subr.mxu0 0.0
    %439 = vmatpush2.msra.mxu0 0.0
    %440 = vmatprep.subr.mxu0 0.0
    %441 = vmatpush2.msra.mxu0 0.0
    %442 = vmatprep.subr.mxu0 0.0
    %443 = vmatpush2.msra.mxu0 0.0
    %444 = vmatprep.subr.mxu0 0.0
    %445 = vmatpush2.msra.mxu0 0.0
    %446 = vmatprep.subr.mxu0 0.0
    %447 = vmatpush2.msra.mxu0 0.0
    %448 = vmatprep.subr.mxu0 0.0
    %449 = vmatpush2.msra.mxu0 0.0
    %450 = vmatprep.subr.mxu0 0.0
    %451 = vmatpush2.msra.mxu0 0.0
    %452 = vmatprep.subr.mxu0 0.0
    %453 = vmatpush2.msra.mxu0 0.0
    %454 = vmatprep.subr.mxu0 0.0
    %455 = vmatpush2.msra.mxu0 0.0
    %456 = vmatprep.subr.mxu0 0.0
    %457 = vmatpush2.msra.mxu0 0.0
    %458 = vmatprep.subr.mxu0 0.0
    %459 = vmatpush2.msra.mxu0 0.0
    %460 = vmatprep.subr.mxu0 0.0
    %461 = vmatpush2.msra.mxu0 0.0
    %462 = vmatprep.subr.mxu0 0.0
    %463 = vmatpush2.msra.mxu0 0.0
    %464 = vmatprep.subr.mxu0 0.0
    %465 = vmatpush2.msra.mxu0 0.0
    %466 = vmatprep.subr.mxu0 0.0
    %467 = vmatpush2.msra.mxu0 0.0
    %468 = vmatprep.subr.mxu0 0.0
    %469 = vmatpush2.msra.mxu0 0.0
    %470 = vmatprep.mubr.f32.mxu0 0.0
    %471 = vmatmul.mubr.f32.gmra.mxu0 %v400
    %v472 = vpop.f32.mrf.mxu0
    %v473 = vadd.f32 0.0, %v472
    %v474 = vpop.f32.mrf.mxu0
    %475 = vdwg.mxu0
    %v476 = vmul.f32 %v45, %v473
    %477 = vst.msk [vmem:[#allocation5] sm:$0xff] %vm57, %v476
    // Predicated region
    $region42: #{tpu_custom_call.1} parent=1 // pred_check
      _
    $region43: #{tpu_custom_call.1} parent=1 // pred_check_branch
      %479 = sbr.rel (0) target = $region45
    $region44: #{tpu_custom_call.1} parent=1 // pred_region
      %s481 = ssub.s32 128, 128
      %482 = vsyncadd [#allocation4], %s481
      %s484 = sshll.u32 [#allocation5], 4
      %s485 = int_to_ptr.vmem [resolvable:$true] %s484
      %487 = dma.vmem_to_hbm [thread:$0]  %s485, 128, %s9, [#allocation4]
    $region45: #{tpu_custom_call.1} parent=1 // pred_fallthru
      _
    // Predicated region
    $region46: #{tpu_custom_call.1} parent=1 // pred_check
      _
    $region47: #{tpu_custom_call.1} parent=1 // pred_check_branch
      %489 = sbr.rel (0) target = $region49
    $region48: #{tpu_custom_call.1} parent=1 // pred_region
      %490 = dma.done [#allocation4], 128
    $region49: #{tpu_custom_call.1} parent=1 // pred_fallthru
      _
    %491 = vsyncpa [#allocation3], 1
    %492 = vsyncpa [#allocation4], 1

</llo_original>
